<compile_context>
chip_gen: v7x
topology: tpu7x:2x2x1
jax: 0.10.0
libtpu: 0.0.40
codegen_flags: <defaults>
</compile_context>

<pallas_src>
import functools

import jax
import jax.numpy as jnp
import numpy as np
from jax import lax
from jax.experimental import pallas as pl
from jax.experimental.pallas import tpu as pltpu

# AR1_Calcium constants (only gain/bias/tau participate in forward)
PARAMS = {
    "gain": {"value": 1.0, "learnable": False},
    "bias": {"value": 0.0, "learnable": False},
    "tau": {"value": 10.0, "learnable": False},
    "var": {"value": 0.1, "learnable": True},
}

# Batch tile cap: 512 * (in + 3*out) * 4 B * 2 (double buffer) stays well under
# the 32 MiB scoped-VMEM default on v7x (and 16 MiB on v5e) for moderate
# feature sizes.
_MAX_BATCH_TILE = 512


def _ar1_constants(params):
    gain = float(params["gain"]["value"])
    bias = float(params["bias"]["value"])
    tau = float(params["tau"]["value"])
    damp = max((tau - 1.0) / tau, 0.0)
    return gain, bias, damp


def _choose_batch_tile(B):
    """Pick a batch tile; pad only when the batch is actually tiled."""
    if B <= _MAX_BATCH_TILE:
        return B, B  # single full-size tile: block dims == array dims, no pad
    tb = _MAX_BATCH_TILE
    return tb, ((B + tb - 1) // tb) * tb


def _ar1_update(spike, h, *, gain, bias, damp):
    cal = h * damp
    cal = cal + spike if gain == 1.0 else cal + gain * spike
    if bias != 0.0:
        cal = cal + bias
    return cal


# ---------------------------------------------------------------------------
# Single-step kernel (the module's forward): one matmul + VPU/EUP epilogue.
# ---------------------------------------------------------------------------
def _calcium_step_kernel(x_ref, w_ref, b_ref, h_ref, cal_ref, spk_ref, *,
                         gain, bias, damp):
    # MXU: contract x [TB, in] with w [out, in] along `in` (torch Linear layout,
    # no transposed copy of W in HBM).
    z = lax.dot_general(
        x_ref[...], w_ref[...],
        dimension_numbers=(((1,), (1,)), ((), ())),
        preferred_element_type=jnp.float32,
    ) + b_ref[...]
    spike = jnp.maximum(jnp.exp(z) - 1.0, 0.0)       # EUP exp, VPU sub/max
    spk_ref[...] = spike.astype(spk_ref.dtype)
    cal = _ar1_update(spike, h_ref[...], gain=gain, bias=bias, damp=damp)
    cal_ref[...] = cal.astype(cal_ref.dtype)


def calcium_generator(x, w, b, hidden, params=PARAMS, out_dtype=jnp.float32):
    """Single step.  x: [B, in], w: [out, in] (torch layout), b: [out], hidden: [B, out]."""
    B, in_size = x.shape
    out_size = w.shape[0]
    gain, bias, damp = _ar1_constants(params)

    tb, B_pad = _choose_batch_tile(B)
    if B_pad != B:  # only when batch is tiled (B > 512)
        x = jnp.pad(x, ((0, B_pad - B), (0, 0)))
        hidden = jnp.pad(hidden, ((0, B_pad - B), (0, 0)))
    b2 = b.reshape(1, out_size)

    kernel = functools.partial(_calcium_step_kernel, gain=gain, bias=bias, damp=damp)
    cal, spk = pl.pallas_call(
        kernel,
        out_shape=(
            jax.ShapeDtypeStruct((B_pad, out_size), out_dtype),
            jax.ShapeDtypeStruct((B_pad, out_size), out_dtype),
        ),
        grid_spec=pltpu.PrefetchScalarGridSpec(
            num_scalar_prefetch=0,
            grid=(B_pad // tb,),
            in_specs=[
                pl.BlockSpec((tb, in_size), lambda i: (i, 0)),
                pl.BlockSpec((out_size, in_size), lambda i: (0, 0)),  # resident
                pl.BlockSpec((1, out_size), lambda i: (0, 0)),        # resident
                pl.BlockSpec((tb, out_size), lambda i: (i, 0)),
            ],
            out_specs=[
                pl.BlockSpec((tb, out_size), lambda i: (i, 0)),
                pl.BlockSpec((tb, out_size), lambda i: (i, 0)),
            ],
        ),
        compiler_params=pltpu.CompilerParams(
            dimension_semantics=("parallel",)),
    )(x, w, b2, hidden)

    if B_pad != B:
        cal = cal[:B]
        spk = spk[:B]
    return cal, spk


# ---------------------------------------------------------------------------
# Fused T-step rollout kernel: hidden lives in VMEM scratch across the time
# axis; W/b stay resident; only x[t] in / cal[t], spk[t] out per grid step.
# ---------------------------------------------------------------------------
def _calcium_rollout_kernel(x_ref, wt_ref, b_ref, h0_ref, cal_ref, spk_ref,
                            h_scr, *, gain, bias, damp):
    @pl.when(pl.program_id(1) == 0)
    def _():  # new batch tile: load the initial hidden state once
        h_scr[...] = h0_ref[...].astype(jnp.float32)

    # W already relaid out to [in, out] once in the wrapper: K on sublanes,
    # no per-step XLU transpose.
    z = jnp.dot(x_ref[...], wt_ref[...],
                preferred_element_type=jnp.float32) + b_ref[...]
    spike = jnp.maximum(jnp.exp(z) - 1.0, 0.0)
    cal = _ar1_update(spike, h_scr[...], gain=gain, bias=bias, damp=damp)
    h_scr[...] = cal
    spk_ref[...] = spike.astype(spk_ref.dtype)
    cal_ref[...] = cal.astype(cal_ref.dtype)


def calcium_generator_rollout(xs, w, b, h0, params=PARAMS, out_dtype=jnp.float32):
    """T-step fused rollout (hidden_t = calcium_t feeds step t+1).

    xs: [T, B, in], w: [out, in], b: [out], h0: [B, out].
    Returns (calcium [T, B, out], spikes [T, B, out]).
    """
    T, B, in_size = xs.shape
    out_size = w.shape[0]
    gain, bias, damp = _ar1_constants(params)

    tb, B_pad = _choose_batch_tile(B)
    if B_pad != B:
        xs = jnp.pad(xs, ((0, 0), (0, B_pad - B), (0, 0)))
        h0 = jnp.pad(h0, ((0, B_pad - B), (0, 0)))
    w_t = jnp.transpose(w)          # one-time relayout to [in, out]
    b2 = b.reshape(1, out_size)

    kernel = functools.partial(_calcium_rollout_kernel, gain=gain, bias=bias, damp=damp)
    cal, spk = pl.pallas_call(
        kernel,
        out_shape=(
            jax.ShapeDtypeStruct((T, B_pad, out_size), out_dtype),
            jax.ShapeDtypeStruct((T, B_pad, out_size), out_dtype),
        ),
        grid_spec=pltpu.PrefetchScalarGridSpec(
            num_scalar_prefetch=0,
            grid=(B_pad // tb, T),   # batch outer (parallel), time inner (carry)
            in_specs=[
                pl.BlockSpec((None, tb, in_size), lambda i, t: (t, i, 0)),
                pl.BlockSpec((in_size, out_size), lambda i, t: (0, 0)),  # resident
                pl.BlockSpec((1, out_size), lambda i, t: (0, 0)),        # resident
                pl.BlockSpec((tb, out_size), lambda i, t: (i, 0)),
            ],
            out_specs=[
                pl.BlockSpec((None, tb, out_size), lambda i, t: (t, i, 0)),
                pl.BlockSpec((None, tb, out_size), lambda i, t: (t, i, 0)),
            ],
            scratch_shapes=[pltpu.VMEM((tb, out_size), jnp.float32)],
        ),
        compiler_params=pltpu.CompilerParams(
            dimension_semantics=("parallel", "arbitrary")),
    )(xs, w_t, b2, h0)

    if B_pad != B:
        cal = cal[:, :B]
        spk = spk[:, :B]
    return cal, spk


# ---------------------------------------------------------------------------
# Pure-JAX references
# ---------------------------------------------------------------------------
def _reference(x, w, b, hidden, params=PARAMS):
    gain, bias, damp = _ar1_constants(params)
    z = x @ w.T + b
    spike = jnp.maximum(jnp.exp(z) - 1.0, 0.0)
    cal = hidden * damp + gain * spike + bias
    return cal, spike


def _reference_rollout(xs, w, b, h0, params=PARAMS):
    h = h0
    cals, spks = [], []
    for t in range(xs.shape[0]):
        c, s = _reference(xs[t], w, b, h, params)
        cals.append(c)
        spks.append(s)
        h = c
    return jnp.stack(cals), jnp.stack(spks)


if __name__ == "__main__":
    B, input_size, output_size, T = 8, 32, 16, 6

    key = jax.random.PRNGKey(0)
    kx, kh, kw, kb, ks = jax.random.split(key, 5)

    # Deterministic synthetic parameters (torch Linear-style fan-in scaling).
    bound = 1.0 / np.sqrt(input_size)
    w = jax.random.uniform(kw, (output_size, input_size), jnp.float32,
                           minval=-bound, maxval=bound)
    b = jax.random.uniform(kb, (output_size,), jnp.float32,
                           minval=-bound, maxval=bound)

    x = jax.random.normal(kx, (B, input_size), jnp.float32)
    hidden = jax.random.normal(kh, (B, output_size), jnp.float32)

    # --- single step (the module's forward) ---
    cal, spk = calcium_generator(x, w, b, hidden)
    jax.block_until_ready((cal, spk))
    cal_ref, spk_ref = _reference(x, w, b, hidden)
    np.testing.assert_allclose(np.asarray(cal), np.asarray(cal_ref),
                               rtol=1e-5, atol=1e-4)
    np.testing.assert_allclose(np.asarray(spk), np.asarray(spk_ref),
                               rtol=1e-5, atol=1e-4)

    # --- fused T-step rollout (hidden carried in VMEM) ---
    xs = jax.random.normal(ks, (T, B, input_size), jnp.float32)
    cal_seq, spk_seq = calcium_generator_rollout(xs, w, b, hidden)
    jax.block_until_ready((cal_seq, spk_seq))
    cal_seq_ref, spk_seq_ref = _reference_rollout(xs, w, b, hidden)
    np.testing.assert_allclose(np.asarray(cal_seq), np.asarray(cal_seq_ref),
                               rtol=1e-5, atol=1e-4)
    np.testing.assert_allclose(np.asarray(spk_seq), np.asarray(spk_seq_ref),
                               rtol=1e-5, atol=1e-4)

    print("KERNEL_OK")
</pallas_src>

<mosaic_0001>
module attributes {stable_mosaic.version = 11 : i64} {
  func.func @_calcium_step_kernel(%arg0: i32, %arg1: memref<8x32xf32, #tpu.memory_space<vmem>>, %arg2: memref<16x32xf32, #tpu.memory_space<vmem>>, %arg3: memref<1x16xf32, #tpu.memory_space<vmem>>, %arg4: memref<8x16xf32, #tpu.memory_space<vmem>>, %arg5: memref<8x16xf32, #tpu.memory_space<vmem>>, %arg6: memref<8x16xf32, #tpu.memory_space<vmem>>) attributes {dimension_semantics = [#tpu.dimension_semantics<parallel>], iteration_bounds = array<i64: 1>, scalar_prefetch = 0 : i64, scratch_operands = 0 : i64, tpu.core_type = #tpu.core_type<tc>, window_params = [{transform_indices = @transform_0, window_bounds = array<i64: 8, 32>}, {pipeline_mode = #tpu.pipeline_mode<synchronous>, transform_indices = @transform_1, window_bounds = array<i64: 16, 32>}, {pipeline_mode = #tpu.pipeline_mode<synchronous>, transform_indices = @transform_2, window_bounds = array<i64: 1, 16>}, {transform_indices = @transform_3, window_bounds = array<i64: 8, 16>}, {transform_indices = @transform_4, window_bounds = array<i64: 8, 16>}, {transform_indices = @transform_5, window_bounds = array<i64: 8, 16>}]} {
    %c0 = arith.constant 0 : index
    %c0_0 = arith.constant 0 : index
    %0 = vector.load %arg1[%c0, %c0_0] : memref<8x32xf32, #tpu.memory_space<vmem>>, vector<8x32xf32>
    %c0_1 = arith.constant 0 : index
    %c0_2 = arith.constant 0 : index
    %1 = vector.load %arg2[%c0_1, %c0_2] : memref<16x32xf32, #tpu.memory_space<vmem>>, vector<16x32xf32>
    %cst = arith.constant dense<0.000000e+00> : vector<8x16xf32>
    %2 = tpu.matmul %0, %1, %cst {dimension_numbers = #tpu.dot_dimension_numbers<[1], [1], [0], [0], [0, 0, 1, 0], [], []>} : vector<8x32xf32>, vector<16x32xf32>, vector<8x16xf32> -> vector<8x16xf32>
    %c0_3 = arith.constant 0 : index
    %c0_4 = arith.constant 0 : index
    %3 = vector.load %arg3[%c0_3, %c0_4] : memref<1x16xf32, #tpu.memory_space<vmem>>, vector<1x16xf32>
    %4 = vector.broadcast %3 : vector<1x16xf32> to vector<8x16xf32>
    %5 = arith.addf %2, %4 : vector<8x16xf32>
    %6 = math.exp %5 : vector<8x16xf32>
    %cst_5 = arith.constant 1.000000e+00 : f32
    %7 = vector.broadcast %cst_5 : f32 to vector<8x16xf32>
    %8 = arith.subf %6, %7 : vector<8x16xf32>
    %cst_6 = arith.constant 0.000000e+00 : f32
    %9 = vector.broadcast %cst_6 : f32 to vector<8x16xf32>
    %10 = arith.maximumf %8, %9 : vector<8x16xf32>
    %c0_7 = arith.constant 0 : index
    %c0_8 = arith.constant 0 : index
    %11 = vector.load %arg6[%c0_7, %c0_8] : memref<8x16xf32, #tpu.memory_space<vmem>>, vector<8x16xf32>
    tpu.vector_store %arg6[%c0_7, %c0_8], %10 {strides = array<i32>} : memref<8x16xf32, #tpu.memory_space<vmem>>, vector<8x16xf32>,
    %c0_9 = arith.constant 0 : index
    %c0_10 = arith.constant 0 : index
    %12 = vector.load %arg4[%c0_9, %c0_10] : memref<8x16xf32, #tpu.memory_space<vmem>>, vector<8x16xf32>
    %cst_11 = arith.constant 0.899999976 : f32
    %13 = vector.broadcast %cst_11 : f32 to vector<8x16xf32>
    %14 = arith.mulf %12, %13 : vector<8x16xf32>
    %15 = arith.addf %14, %10 : vector<8x16xf32>
    %c0_12 = arith.constant 0 : index
    %c0_13 = arith.constant 0 : index
    %16 = vector.load %arg5[%c0_12, %c0_13] : memref<8x16xf32, #tpu.memory_space<vmem>>, vector<8x16xf32>
    tpu.vector_store %arg5[%c0_12, %c0_13], %15 {strides = array<i32>} : memref<8x16xf32, #tpu.memory_space<vmem>>, vector<8x16xf32>,
    return
  }
  func.func @transform_0(%arg0: i32) -> (i32, i32) {
    %c0_i32 = arith.constant 0 : i32
    %c0_i32_0 = arith.constant 0 : i32
    return %arg0, %c0_i32 : i32, i32
  }
  func.func @transform_1(%arg0: i32) -> (i32, i32) {
    %c0_i32 = arith.constant 0 : i32
    %c0_i32_0 = arith.constant 0 : i32
    %c0_i32_1 = arith.constant 0 : i32
    return %c0_i32, %c0_i32_0 : i32, i32
  }
  func.func @transform_2(%arg0: i32) -> (i32, i32) {
    %c0_i32 = arith.constant 0 : i32
    %c0_i32_0 = arith.constant 0 : i32
    %c0_i32_1 = arith.constant 0 : i32
    return %c0_i32, %c0_i32_0 : i32, i32
  }
  func.func @transform_3(%arg0: i32) -> (i32, i32) {
    %c0_i32 = arith.constant 0 : i32
    %c0_i32_0 = arith.constant 0 : i32
    return %arg0, %c0_i32 : i32, i32
  }
  func.func @transform_4(%arg0: i32) -> (i32, i32) {
    %c0_i32 = arith.constant 0 : i32
    %c0_i32_0 = arith.constant 0 : i32
    return %arg0, %c0_i32 : i32, i32
  }
  func.func @transform_5(%arg0: i32) -> (i32, i32) {
    %c0_i32 = arith.constant 0 : i32
    %c0_i32_0 = arith.constant 0 : i32
    return %arg0, %c0_i32 : i32, i32
  }
}

</mosaic_0001>

<llo_original>
// kernel: tpu_custom_call.1
$region0: #{tpu_custom_call.1}
  #allocation0 [shape = 'u32[]', space=smem, size = 0x4, offset = 0x4, fixed_abs, tag = 'smem constant byte address 0x4 - core index']
  #allocation1 [shape = 'u32[144,128]{1,0:T(1,128)}', space=vmem, size = 0x12000, scoped, tag = 'internal scratch']
  %s0 = inlined_call_operand.hbm [shape: f32[8,32], index: 0, kind: input, shape index: {}]
  %s1 = inlined_call_operand.hbm [shape: f32[16,32], index: 1, kind: input, shape index: {}]
  %s2 = inlined_call_operand.vmem [shape: f32[1,16], index: 2, kind: input, shape index: {}]
  %s3 = inlined_call_operand.vmem [shape: f32[8,16], index: 3, kind: input, shape index: {}]
  %s4 = inlined_call_operand.hbm [shape: f32[8,16], index: 4, kind: output, shape index: {0}]
  %s5 = inlined_call_operand.hbm [shape: f32[8,16], index: 5, kind: output, shape index: {1}]
  %6 = xla_tuple %s4, %s5
  %s7 = sld [smem:[#allocation0]]
  $region42: #{tpu_custom_call.1} parent=0
    _
  %s9 = ssub.s32 1, %s7
  %s10 = scalar_select 0, %s9, %s7
  $region1: #{tpu_custom_call.1} parent=0
    #allocation2 [shape = 'u8[4096]{0}', space=vmem, size = 0x1000, scoped, tag = 'input window, operand 0, single buffered']
    #allocation3 [shape = 's32[1]{0}', space=sflag, size = 0x4, scoped, tag = 'scoped memory for tpu_custom_call.1']
    #allocation4 [shape = 's32[1]{0}', space=sflag, size = 0x4, scoped, tag = 'scoped memory for tpu_custom_call.1']
    #allocation5 [shape = 'u8[8192]{0}', space=vmem, size = 0x2000, scoped, tag = 'input window, operand 1, single buffered']
    #allocation6 [shape = 's32[1]{0}', space=sflag, size = 0x4, scoped, tag = 'scoped memory for tpu_custom_call.1']
    #allocation7 [shape = 'u8[4096]{0}', space=vmem, size = 0x1000, scoped, tag = 'output window, operand 0, single buffered']
    #allocation8 [shape = 'u8[4096]{0}', space=vmem, size = 0x1000, scoped, tag = 'output window, operand 1, single buffered']
    #allocation9 [shape = 's32[1]{0}', space=sflag, size = 0x4, scoped, tag = 'scoped memory for tpu_custom_call.1']
    %11 = vsyncpa [#allocation3], 0
    %12 = vsyncpa [#allocation6], 0
    %13 = vsyncpa [#allocation4], 0
    %14 = vsyncpa [#allocation9], 0
    // Predicated region
    $region2: #{tpu_custom_call.1} parent=1 // pred_check
      _
    $region3: #{tpu_custom_call.1} parent=1 // pred_check_branch
      %16 = sbr.rel (0) target = $region5
    $region4: #{tpu_custom_call.1} parent=1 // pred_region
      %s18 = ssub.s32 128, 128
      %19 = vsyncadd [#allocation3], %s18
      %s21 = sshll.u32 [#allocation2], 4
      %s22 = int_to_ptr.vmem [resolvable:$true] %s21
      %24 = dma.hbm_to_vmem [thread:$0]  %s0, 128, %s22, [#allocation3]
    $region5: #{tpu_custom_call.1} parent=1 // pred_fallthru
      _
    // Predicated region
    $region6: #{tpu_custom_call.1} parent=1 // pred_check
      _
    $region7: #{tpu_custom_call.1} parent=1 // pred_check_branch
      %26 = sbr.rel (0) target = $region9
    $region8: #{tpu_custom_call.1} parent=1 // pred_region
      %s28 = ssub.s32 256, 256
      %29 = vsyncadd [#allocation6], %s28
      %s30 = sshll.u32 [#allocation5], 4
      %s31 = int_to_ptr.vmem [resolvable:$true] %s30
      %36 = dma.hbm_to_vmem [thread:$0]  %s1, 256, %s31, [#allocation6], 128, 128, 8
    $region9: #{tpu_custom_call.1} parent=1 // pred_fallthru
      _
    // Predicated region
    $region10: #{tpu_custom_call.1} parent=1 // pred_check
      _
    $region11: #{tpu_custom_call.1} parent=1 // pred_check_branch
      %38 = sbr.rel (0) target = $region13
    $region12: #{tpu_custom_call.1} parent=1 // pred_region
      _
    $region13: #{tpu_custom_call.1} parent=1 // pred_fallthru
      _
    // Predicated region
    $region14: #{tpu_custom_call.1} parent=1 // pred_check
      _
    $region15: #{tpu_custom_call.1} parent=1 // pred_check_branch
      %40 = sbr.rel (0) target = $region17
    $region16: #{tpu_custom_call.1} parent=1 // pred_region
      _
    $region17: #{tpu_custom_call.1} parent=1 // pred_fallthru
      _
    // Predicated region
    $region18: #{tpu_custom_call.1} parent=1 // pred_check
      _
    $region19: #{tpu_custom_call.1} parent=1 // pred_check_branch
      %42 = sbr.rel (0) target = $region21
    $region20: #{tpu_custom_call.1} parent=1 // pred_region
      %43 = dma.done [#allocation3], 128
    $region21: #{tpu_custom_call.1} parent=1 // pred_fallthru
      _
    // Predicated region
    $region22: #{tpu_custom_call.1} parent=1 // pred_check
      _
    $region23: #{tpu_custom_call.1} parent=1 // pred_check_branch
      %45 = sbr.rel (0) target = $region25
    $region24: #{tpu_custom_call.1} parent=1 // pred_region
      %46 = dma.done [#allocation6], 256
    $region25: #{tpu_custom_call.1} parent=1 // pred_fallthru
      _
    %v47 = vld [vmem:[#allocation2] sm:$0xff]
    %v48 = vld [vmem:[#allocation5] sm:$0xff]
    %v49 = vld [vmem:[#allocation5 + $0x8] sm:$0xff]
    %v50 = vld [vmem:[%s2] sm:$0x1]
    %v52 = vlaneseq
    %v53 = vshrl.u32 %v52, 7
    %v54 = vsub.s32 0, %v53
    %v55 = vrot.slane %v50, %v54
    %vm57 = vcmask 261120
    %v59 = vsel %vm57, %v47, 0
    %v62 = vsel %vm57, %v48, 0
    %v65 = vsel %vm57, %v49, 0
    %67 = vmatprep.subr.mxu0 0.0
    %68 = vmatpush1.xpose.msra.mxu0 %v62
    %69 = vmatprep.subr.mxu0 0.0
    %70 = vmatpush1.xpose.msra.mxu0 %v65
    %71 = vmatprep.subr.mxu0 0.0
    %72 = vmatpush1.xpose.msra.mxu0 0.0
    %73 = vmatprep.subr.mxu0 0.0
    %74 = vmatpush1.xpose.msra.mxu0 0.0
    %75 = vmatprep.subr.mxu0 0.0
    %76 = vmatpush1.xpose.msra.mxu0 0.0
    %77 = vmatprep.subr.mxu0 0.0
    %78 = vmatpush1.xpose.msra.mxu0 0.0
    %79 = vmatprep.subr.mxu0 0.0
    %80 = vmatpush1.xpose.msra.mxu0 0.0
    %81 = vmatprep.subr.mxu0 0.0
    %82 = vmatpush1.xpose.msra.mxu0 0.0
    %83 = vmatprep.subr.mxu0 0.0
    %84 = vmatpush1.xpose.msra.mxu0 0.0
    %85 = vmatprep.subr.mxu0 0.0
    %86 = vmatpush1.xpose.msra.mxu0 0.0
    %87 = vmatprep.subr.mxu0 0.0
    %88 = vmatpush1.xpose.msra.mxu0 0.0
    %89 = vmatprep.subr.mxu0 0.0
    %90 = vmatpush1.xpose.msra.mxu0 0.0
    %91 = vmatprep.subr.mxu0 0.0
    %92 = vmatpush1.xpose.msra.mxu0 0.0
    %93 = vmatprep.subr.mxu0 0.0
    %94 = vmatpush1.xpose.msra.mxu0 0.0
    %95 = vmatprep.subr.mxu0 0.0
    %96 = vmatpush1.xpose.msra.mxu0 0.0
    %97 = vmatprep.subr.mxu0 0.0
    %98 = vmatpush1.xpose.msra.mxu0 0.0
    %99 = vmatprep.subr.mxu0 0.0
    %100 = vmatpush1.xpose.msra.mxu0 0.0
    %101 = vmatprep.subr.mxu0 0.0
    %102 = vmatpush1.xpose.msra.mxu0 0.0
    %103 = vmatprep.subr.mxu0 0.0
    %104 = vmatpush1.xpose.msra.mxu0 0.0
    %105 = vmatprep.subr.mxu0 0.0
    %106 = vmatpush1.xpose.msra.mxu0 0.0
    %107 = vmatprep.subr.mxu0 0.0
    %108 = vmatpush1.xpose.msra.mxu0 0.0
    %109 = vmatprep.subr.mxu0 0.0
    %110 = vmatpush1.xpose.msra.mxu0 0.0
    %111 = vmatprep.subr.mxu0 0.0
    %112 = vmatpush1.xpose.msra.mxu0 0.0
    %113 = vmatprep.subr.mxu0 0.0
    %114 = vmatpush1.xpose.msra.mxu0 0.0
    %115 = vmatprep.subr.mxu0 0.0
    %116 = vmatpush1.xpose.msra.mxu0 0.0
    %117 = vmatprep.subr.mxu0 0.0
    %118 = vmatpush1.xpose.msra.mxu0 0.0
    %119 = vmatprep.subr.mxu0 0.0
    %120 = vmatpush1.xpose.msra.mxu0 0.0
    %121 = vmatprep.subr.mxu0 0.0
    %122 = vmatpush1.xpose.msra.mxu0 0.0
    %123 = vmatprep.subr.mxu0 0.0
    %124 = vmatpush1.xpose.msra.mxu0 0.0
    %125 = vmatprep.subr.mxu0 0.0
    %126 = vmatpush1.xpose.msra.mxu0 0.0
    %127 = vmatprep.subr.mxu0 0.0
    %128 = vmatpush1.xpose.msra.mxu0 0.0
    %129 = vmatprep.subr.mxu0 0.0
    %130 = vmatpush1.xpose.msra.mxu0 0.0
    %131 = vmatprep.mubr.f32.mxu0 0.0
    %132 = vmatmul.mubr.f32.gmra.mrb[0].mxu0 %v59
    %v133 = vpop.f32.mrb[0].mxu0
    %v134 = vadd.f32 %v55, %v133
    %v135 = vpop.f32.mrb[0].mxu0
    %136 = vdwg.mxu0
    %v137 = vmul.f32 %v134, 1.442695
    %v138 = vpow.pop %v137
    %v139 = vsub.f32 %v138, 1.0
    %v140 = vmax.f32 %v139, 0.0
    %vm141 = vcmask 130048
    %142 = vst.msk [vmem:[#allocation8] sm:$0xff] %vm141, %v140
    %v143 = vld [vmem:[%s3] sm:$0xff]
    %v144 = vmul.f32 %v143, 0.9
    %v145 = vadd.f32 %v144, %v140
    %146 = vst.msk [vmem:[#allocation7] sm:$0xff] %vm141, %v145
    // Predicated region
    $region26: #{tpu_custom_call.1} parent=1 // pred_check
      _
    $region27: #{tpu_custom_call.1} parent=1 // pred_check_branch
      %148 = sbr.rel (0) target = $region29
    $region28: #{tpu_custom_call.1} parent=1 // pred_region
      %s150 = ssub.s32 128, 128
      %151 = vsyncadd [#allocation4], %s150
      %s153 = sshll.u32 [#allocation7], 4
      %s154 = int_to_ptr.vmem [resolvable:$true] %s153
      %156 = dma.vmem_to_hbm [thread:$0]  %s154, 128, %s4, [#allocation4]
    $region29: #{tpu_custom_call.1} parent=1 // pred_fallthru
      _
    // Predicated region
    $region30: #{tpu_custom_call.1} parent=1 // pred_check
      _
    $region31: #{tpu_custom_call.1} parent=1 // pred_check_branch
      %158 = sbr.rel (0) target = $region33
    $region32: #{tpu_custom_call.1} parent=1 // pred_region
      %s160 = ssub.s32 128, 128
      %161 = vsyncadd [#allocation9], %s160
      %s163 = sshll.u32 [#allocation8], 4
      %s164 = int_to_ptr.vmem [resolvable:$true] %s163
      %166 = dma.vmem_to_hbm [thread:$0]  %s164, 128, %s5, [#allocation9]
    $region33: #{tpu_custom_call.1} parent=1 // pred_fallthru
      _
    // Predicated region
    $region34: #{tpu_custom_call.1} parent=1 // pred_check
      _
    $region35: #{tpu_custom_call.1} parent=1 // pred_check_branch
      %168 = sbr.rel (0) target = $region37
    $region36: #{tpu_custom_call.1} parent=1 // pred_region
      %169 = dma.done [#allocation4], 128
    $region37: #{tpu_custom_call.1} parent=1 // pred_fallthru
      _
    // Predicated region
    $region38: #{tpu_custom_call.1} parent=1 // pred_check
      _
    $region39: #{tpu_custom_call.1} parent=1 // pred_check_branch
      %171 = sbr.rel (0) target = $region41
    $region40: #{tpu_custom_call.1} parent=1 // pred_region
      %172 = dma.done [#allocation9], 128
    $region41: #{tpu_custom_call.1} parent=1 // pred_fallthru
      _
    %173 = vsyncpa [#allocation3], 1
    %174 = vsyncpa [#allocation6], 1
    %175 = vsyncpa [#allocation4], 1
    %176 = vsyncpa [#allocation9], 1

</llo_original>
